<compile_context>
chip_gen: v7x
topology: tpu7x:2x2x1
jax: 0.10.0
libtpu: 0.0.40
codegen_flags: <defaults>
</compile_context>

<pallas_src>
import functools

import jax
import jax.numpy as jnp
import numpy as np
from jax.experimental import pallas as pl
from jax.experimental.pallas import tpu as pltpu


def rbf_kernel(dist_ref, centers_ref, out_ref, *, coef):
    d = dist_ref[...]                                  # (TN, 1) f32 tile
    c = centers_ref[...]                               # (1, K)  f32 (resident)
    radial = d - c                                     # (TN, K) VPU broadcast
    out_ref[...] = jnp.exp(coef * radial * radial)     # EUP exp


def _round_up(x, m):
    return ((x + m - 1) // m) * m


def rbf_forward(distance, centers, coef, *, tile_e=4096):
    """distance: (E,) or (E,1) float; centers: (K,) float -> (E, K) float32."""
    e = int(distance.shape[0])
    k = int(centers.shape[0])

    if e == 0:
        return jnp.zeros((0, k), dtype=jnp.float32)

    dist2d = distance.reshape(e, 1).astype(jnp.float32)
    centers2d = centers.reshape(1, k).astype(jnp.float32)

    # Tile selection: cap at tile_e, but keep >= ~8 grid steps for large E so
    # DMA/compute overlap and (on v7x) both TensorCores get work; tiny E maps
    # to small blocks. tn is always a multiple of 8 sublanes; the ragged final
    # block (E % tn != 0) is masked by Pallas — no padding, no output slice.
    tn = min(tile_e, _round_up(pl.cdiv(e, 8), 8))
    grid = pl.cdiv(e, tn)

    # VMEM budget (double-buffered): output tile lane-pads K to a multiple of
    # 128; the (tn, 1) distance tile lane-pads to (tn, 128).
    k_pad = _round_up(k, 128)
    need = 2 * (tn * k_pad * 4) + 2 * (tn * 128 * 4) + 2 * (8 * k_pad * 4)
    vmem_limit = min(max(int(1.25 * need) + (2 << 20), 32 << 20), 56 << 20)

    out = pl.pallas_call(
        functools.partial(rbf_kernel, coef=coef),
        out_shape=jax.ShapeDtypeStruct((e, k), jnp.float32),
        grid_spec=pl.GridSpec(
            grid=(grid,),
            in_specs=[
                pl.BlockSpec((tn, 1), lambda i: (i, 0)),   # per-tile distances
                pl.BlockSpec((1, k), lambda i: (0, 0)),    # centers: resident
            ],
            out_specs=pl.BlockSpec((tn, k), lambda i: (i, 0)),
        ),
        compiler_params=pltpu.CompilerParams(
            dimension_semantics=("parallel",),
            vmem_limit_bytes=vmem_limit,
        ),
    )(dist2d, centers2d)
    return out


def make_rbf_params(low=0.0, high=30.0, gap=0.1):
    """Mirror RBFLayer.__init__: centers buffer + exp coefficient."""
    n_centers = int(np.ceil((high - low) / gap))
    if n_centers < 2:
        raise ValueError("RBFLayer requires at least 2 centers (centers[1] access).")
    centers_np = np.linspace(low, high, n_centers)
    gap_eff = centers_np[1] - centers_np[0]        # module overwrites _gap
    coef = -1.0 / float(gap_eff)
    return jnp.asarray(centers_np, dtype=jnp.float32), coef


# TODO(synk): DGL graph plumbing (g.apply_edges / g.edata) has no Pallas
# equivalent; this implements the per-edge dis2rbf math on a dense distance
# vector, which is the entire numeric content of RBFLayer.forward.


if __name__ == "__main__":
    key = jax.random.PRNGKey(0)

    centers, coef = make_rbf_params(low=0.0, high=30.0, gap=0.1)   # K = 300
    num_edges = 64                                                 # small "graph"
    distance = jax.random.uniform(
        key, (num_edges,), minval=0.0, maxval=30.0, dtype=jnp.float32
    )

    rbf = rbf_forward(distance, centers, coef)
    rbf = jax.block_until_ready(rbf)

    # Reference: plain JAX, same math as RBFLayer.dis2rbf.
    radial = distance[:, None] - centers[None, :]
    ref = jnp.exp(coef * radial * radial)

    assert rbf.shape == (num_edges, centers.shape[0])
    assert jnp.allclose(rbf, ref, atol=1e-5, rtol=1e-5), "mismatch vs reference"

    print("KERNEL_OK")
</pallas_src>

<mosaic_0001>
module attributes {stable_mosaic.version = 11 : i64} {
  func.func @rbf_kernel(%arg0: i32, %arg1: memref<8x1xf32, #tpu.memory_space<vmem>>, %arg2: memref<1x300xf32, #tpu.memory_space<vmem>>, %arg3: memref<8x300xf32, #tpu.memory_space<vmem>>) attributes {dimension_semantics = [#tpu.dimension_semantics<parallel>], iteration_bounds = array<i64: 8>, scalar_prefetch = 0 : i64, scratch_operands = 0 : i64, tpu.core_type = #tpu.core_type<tc>, window_params = [{transform_indices = @transform_0, window_bounds = array<i64: 8, 1>}, {pipeline_mode = #tpu.pipeline_mode<synchronous>, transform_indices = @transform_1, window_bounds = array<i64: 1, 300>}, {transform_indices = @transform_2, window_bounds = array<i64: 8, 300>}]} {
    %c0 = arith.constant 0 : index
    %c0_0 = arith.constant 0 : index
    %0 = vector.load %arg1[%c0, %c0_0] : memref<8x1xf32, #tpu.memory_space<vmem>>, vector<8x1xf32>
    %c0_1 = arith.constant 0 : index
    %c0_2 = arith.constant 0 : index
    %1 = vector.load %arg2[%c0_1, %c0_2] : memref<1x300xf32, #tpu.memory_space<vmem>>, vector<1x300xf32>
    %2 = vector.broadcast %0 : vector<8x1xf32> to vector<8x300xf32>
    %3 = vector.broadcast %1 : vector<1x300xf32> to vector<8x300xf32>
    %4 = arith.subf %2, %3 : vector<8x300xf32>
    %cst = arith.constant -9.96666622 : f32
    %5 = vector.broadcast %cst : f32 to vector<8x300xf32>
    %6 = arith.mulf %5, %4 : vector<8x300xf32>
    %7 = arith.mulf %6, %4 : vector<8x300xf32>
    %8 = math.exp %7 : vector<8x300xf32>
    %c0_3 = arith.constant 0 : index
    %c0_4 = arith.constant 0 : index
    %9 = vector.load %arg3[%c0_3, %c0_4] : memref<8x300xf32, #tpu.memory_space<vmem>>, vector<8x300xf32>
    tpu.vector_store %arg3[%c0_3, %c0_4], %8 {strides = array<i32>} : memref<8x300xf32, #tpu.memory_space<vmem>>, vector<8x300xf32>,
    return
  }
  func.func @transform_0(%arg0: i32) -> (i32, i32) {
    %c0_i32 = arith.constant 0 : i32
    %c0_i32_0 = arith.constant 0 : i32
    return %arg0, %c0_i32 : i32, i32
  }
  func.func @transform_1(%arg0: i32) -> (i32, i32) {
    %c0_i32 = arith.constant 0 : i32
    %c0_i32_0 = arith.constant 0 : i32
    %c0_i32_1 = arith.constant 0 : i32
    return %c0_i32, %c0_i32_0 : i32, i32
  }
  func.func @transform_2(%arg0: i32) -> (i32, i32) {
    %c0_i32 = arith.constant 0 : i32
    %c0_i32_0 = arith.constant 0 : i32
    return %arg0, %c0_i32 : i32, i32
  }
}

</mosaic_0001>

<llo_original>
// kernel: tpu_custom_call.1
$region0: #{tpu_custom_call.1}
  #allocation0 [shape = 'u32[]', space=smem, size = 0x4, offset = 0x4, fixed_abs, tag = 'smem constant byte address 0x4 - core index']
  #allocation1 [shape = 'u32[144,128]{1,0:T(1,128)}', space=vmem, size = 0x12000, scoped, tag = 'internal scratch']
  %s0 = inlined_call_operand.vmem [shape: f32[64,1], index: 0, kind: input, shape index: {}]
  %s1 = inlined_call_operand.vmem [shape: f32[1,300], index: 1, kind: input, shape index: {}]
  %s2 = inlined_call_operand.hbm [shape: f32[64,300], index: 2, kind: output, shape index: {}]
  %s3 = sld [smem:[#allocation0]]
  $region41: #{tpu_custom_call.1} parent=0
    _
  %s5 = ssub.s32 1, %s3
  %s6 = scalar_select 0, %s5, %s3
  $region1: #{tpu_custom_call.1} parent=0
    #allocation2 [shape = 'u8[24576]{0}', space=vmem, size = 0x6000, scoped, tag = 'output window, operand 0']
    #allocation3 [shape = 's32[2]{0}', space=sflag, size = 0x8, scoped, tag = 'scoped memory for tpu_custom_call.1']
    %7 = vsyncpa [#allocation3], 0
    %s8 = scalar_lea.sflag [#allocation3], 1
    %9 = vsyncpa %s8, 0
    loop: start=0, step=1, limit=10
    $region2: #{tpu_custom_call.1} parent=1 // loop_pre_header
      _
    $region3: #{tpu_custom_call.1} parent=1 // loop_header
      %s11 = sphi 0, %s15
      %p12 = scmp.ge.s32.totalorder %s11, 10
      %s21 = sphi 0, %s23
      %s24 = sphi 0, %s21
      %s25 = sphi 0, %s24
      %s41 = sphi 0, %s25
      %s45 = sphi 0, %s45
      %s47 = sphi 0, %s45
      %s48 = sphi 0, %s47
      %s62 = sphi 0, %s48
      %s68 = sphi 0, %s70
      %s71 = sphi 0, %s68
      %s72 = sphi 0, %s71
      %s88 = sphi 0, %s72
    $region4: #{tpu_custom_call.1} parent=1 // loop_header_branch
      %14 = sbr.rel (%p12) target = $region8
    $region5: #{tpu_custom_call.1} parent=1 // loop_body
      %s16 = ssub.s32 %s11, 1
      %s17 = ssub.s32 %s11, 2
      %s18 = sadd.s32 %s11, 1
      %s19 = ssub.s32 %s11, %s18
      %p20 = scmp.eq.s32.totalorder %s19, 0
      %s22 = sadd.s32 %s21, 1
      %s23 = scalar_select %p20, %s21, %s22
      %p26 = pneg %p20
      %p27 = scmp.eq.s32.totalorder %s11, 7
      %p28 = por %p26, %p27
      %p29 = scmp.ne.s32.totalorder %s21, %s24
      %p30 = scmp.eq.s32.totalorder %s11, 0
      %p31 = por %p29, %p30
      %p32 = scmp.ne.s32.totalorder %s21, %s24
      %p33 = scmp.eq.s32.totalorder %s16, 7
      %p34 = por %p32, %p33
      %p35 = scmp.ne.s32.totalorder %s24, %s25
      %p36 = scmp.eq.s32.totalorder %s16, 0
      %p37 = por %p35, %p36
      %p38 = scmp.ne.s32.totalorder %s24, %s25
      %p39 = scmp.eq.s32.totalorder %s17, 7
      %p40 = por %p38, %p39
      %p42 = scmp.ne.s32.totalorder %s25, %s41
      %p43 = scmp.eq.s32.totalorder %s17, 0
      %p44 = por %p42, %p43
      %s46 = sadd.s32 %s45, 1
      %p49 = scmp.eq.s32.totalorder %s11, 7
      %p50 = scmp.ne.s32.totalorder %s45, %s47
      %p51 = scmp.eq.s32.totalorder %s11, 0
      %p52 = por %p50, %p51
      %p53 = scmp.ne.s32.totalorder %s45, %s47
      %p54 = scmp.eq.s32.totalorder %s16, 7
      %p55 = por %p53, %p54
      %p56 = scmp.ne.s32.totalorder %s47, %s48
      %p57 = scmp.eq.s32.totalorder %s16, 0
      %p58 = por %p56, %p57
      %p59 = scmp.ne.s32.totalorder %s47, %s48
      %p60 = scmp.eq.s32.totalorder %s17, 7
      %p61 = por %p59, %p60
      %p63 = scmp.ne.s32.totalorder %s48, %s62
      %p64 = scmp.eq.s32.totalorder %s17, 0
      %p65 = por %p63, %p64
      %s66 = ssub.s32 %s11, %s18
      %p67 = scmp.eq.s32.totalorder %s66, 0
      %s69 = sadd.s32 %s68, 1
      %s70 = scalar_select %p67, %s68, %s69
      %p73 = pneg %p67
      %p74 = scmp.eq.s32.totalorder %s11, 7
      %p75 = por %p73, %p74
      %p76 = scmp.ne.s32.totalorder %s68, %s71
      %p77 = scmp.eq.s32.totalorder %s11, 0
      %p78 = por %p76, %p77
      %p79 = scmp.ne.s32.totalorder %s68, %s71
      %p80 = scmp.eq.s32.totalorder %s16, 7
      %p81 = por %p79, %p80
      %p82 = scmp.ne.s32.totalorder %s71, %s72
      %p83 = scmp.eq.s32.totalorder %s16, 0
      %p84 = por %p82, %p83
      %p85 = scmp.ne.s32.totalorder %s71, %s72
      %p86 = scmp.eq.s32.totalorder %s17, 7
      %p87 = por %p85, %p86
      %p89 = scmp.ne.s32.totalorder %s72, %s88
      %p90 = scmp.eq.s32.totalorder %s17, 0
      %p91 = por %p89, %p90
      %p92 = scmp.le.s32.totalorder 1, %s11
      %p93 = scmp.lt.s32.totalorder %s11, 9
      %p94 = pnand %p92, %p93
      %p95 = pneg %p94
      // Predicated region
      $region9: #{tpu_custom_call.1} parent=5 // pred_check
        _
      $region10: #{tpu_custom_call.1} parent=5 // pred_check_branch
        %97 = sbr.rel (%p94) target = $region12
      $region11: #{tpu_custom_call.1} parent=5 // pred_region
        %s98 = ssub.s32 %s11, 1
        // Predicated region
        $region13: #{tpu_custom_call.1} parent=11 // pred_check
          %p99 = pneg %p58
        $region14: #{tpu_custom_call.1} parent=11 // pred_check_branch
          %101 = sbr.rel (%p99) target = $region16
        $region15: #{tpu_custom_call.1} parent=11 // pred_region
          _
        $region16: #{tpu_custom_call.1} parent=11 // pred_fallthru
          _
      $region12: #{tpu_custom_call.1} parent=5 // pred_fallthru
        _
      %p102 = scmp.lt.s32.totalorder %s11, 8
      // Predicated region
      $region17: #{tpu_custom_call.1} parent=5 // pred_check
        %p103 = pneg %p102
      $region18: #{tpu_custom_call.1} parent=5 // pred_check_branch
        %105 = sbr.rel (%p103) target = $region20
      $region19: #{tpu_custom_call.1} parent=5 // pred_region
        // Predicated region
        $region21: #{tpu_custom_call.1} parent=19 // pred_check
          %p106 = pneg %p31
        $region22: #{tpu_custom_call.1} parent=19 // pred_check_branch
          %108 = sbr.rel (%p106) target = $region24
        $region23: #{tpu_custom_call.1} parent=19 // pred_region
          %p109 = scmp.lt.s32.totalorder %s11, 7
          %s110 = scalar_select %p109, %s11, 7
          %s111 = smul.addr %s110, 8
          %s112 = scalar_lea.vmem %s0, %s111
        $region24: #{tpu_custom_call.1} parent=19 // pred_fallthru
          _
      $region20: #{tpu_custom_call.1} parent=5 // pred_fallthru
        _
      %p113 = scmp.le.s32.totalorder 1, %s11
      %p114 = scmp.lt.s32.totalorder %s11, 9
      %p115 = pnand %p113, %p114
      %p116 = pneg %p115
      // Predicated region
      $region25: #{tpu_custom_call.1} parent=5 // pred_check
        _
      $region26: #{tpu_custom_call.1} parent=5 // pred_check_branch
        %118 = sbr.rel (%p115) target = $region28
      $region27: #{tpu_custom_call.1} parent=5 // pred_region
        %s119 = ssub.s32 %s11, 1
        %p120 = scmp.lt.s32.totalorder %s16, 7
        %s121 = scalar_select %p120, %s16, 7
        %s122 = smul.addr %s121, 8
        %s123 = scalar_lea.vmem %s0, %s122
        %p124 = pneg %p37
        %p125 = pneg %p34
        %p126 = pneg %p58
        %p127 = pneg %p55
        %p128 = pneg %p84
        %p129 = pneg %p81
        %s130 = sand.u32 %s71, 1
        %s131 = scalar_lea.sflag [#allocation3], %s130
        %s132 = sand.u32 %s71, 1
        %s133 = smul.addr %s132, 24
        %s134 = scalar_lea.vmem [#allocation2], %s133
        %p135 = scmp.lt.s32.totalorder %s16, 7
        %s136 = scalar_select %p135, %s16, 7
        %s137 = smul.addr %s136, 8
        %s138 = scalar_lea.vmem %s0, %s137
        %v139 = vld [vmem:[%s138] sm:$0xff]
        %v140 = vld [vmem:[%s1] sm:$0x7]
        %142 = vset.pattern.permute.xlu0 0
        %143 = vperm.xlu0 %142, %v139
        %v144 = vpop.permute.xlu0 %143
        %v147 = vlaneseq
        %v148 = vshrl.u32 %v147, 7
        %v149 = vsub.s32 0, %v148
        %v150 = vrot.slane %v140, %v149
        %v151 = vlaneseq
        %v152 = vshrl.u32 %v151, 7
        %v153 = vsub.s32 1, %v152
        %v154 = vrot.slane %v140, %v153
        %v155 = vlaneseq
        %v156 = vshrl.u32 %v155, 7
        %v157 = vsub.s32 2, %v156
        %v158 = vrot.slane %v140, %v157
        %v162 = vsub.f32 %v144, %v150
        %v163 = vsub.f32 %v144, %v154
        %v164 = vsub.f32 %v144, %v158
        %v165 = vmul.f32 %v162, -9.966666
        %v166 = vmul.f32 %v163, -9.966666
        %v167 = vmul.f32 %v164, -9.966666
        %v168 = vmul.f32 %v165, %v162
        %v169 = vmul.f32 %v166, %v163
        %v170 = vmul.f32 %v167, %v164
        %v171 = vmul.f32 %v168, 1.442695
        %v172 = vpow.pop %v171
        %v173 = vmul.f32 %v169, 1.442695
        %v174 = vpow.pop %v173
        %v175 = vmul.f32 %v170, 1.442695
        %v176 = vpow.pop %v175
        %177 = vst [vmem:[%s134] sm:$0xff] %v172
        %178 = vst [vmem:[%s134 + $0x8] sm:$0xff] %v174
        %vm179 = vcmask 359424
        %180 = vst.msk [vmem:[%s134 + $0x10] sm:$0xff] %vm179, %v176
        %s181 = sand.u32 %s71, 1
        %s182 = scalar_lea.sflag [#allocation3], %s181
        %s183 = sand.u32 %s71, 1
        %s184 = smul.addr %s183, 24
        %s185 = scalar_lea.vmem [#allocation2], %s184
        // Predicated region
        $region29: #{tpu_custom_call.1} parent=27 // pred_check
          %p186 = pneg %p81
        $region30: #{tpu_custom_call.1} parent=27 // pred_check_branch
          %188 = sbr.rel (%p186) target = $region32
        $region31: #{tpu_custom_call.1} parent=27 // pred_region
          %s190 = ssub.s32 384, 384
          %191 = vsyncadd %s182, %s190
          %s192 = smul.addr %s16, 3
          %s193 = smul.addr %s192, 128
          %s194 = scalar_lea.hbm %s2, %s193
          %s196 = sshll.u32 %s185, 4
          %s197 = int_to_ptr.vmem [resolvable:$true] %s196
          %199 = dma.vmem_to_hbm [thread:$0]  %s197, 384, %s194, %s182
        $region32: #{tpu_custom_call.1} parent=27 // pred_fallthru
          _
      $region28: #{tpu_custom_call.1} parent=5 // pred_fallthru
        _
      %p200 = scmp.le.s32.totalorder 2, %s11
      // Predicated region
      $region33: #{tpu_custom_call.1} parent=5 // pred_check
        %p201 = pneg %p200
      $region34: #{tpu_custom_call.1} parent=5 // pred_check_branch
        %203 = sbr.rel (%p201) target = $region36
      $region35: #{tpu_custom_call.1} parent=5 // pred_region
        %s204 = ssub.s32 %s11, 2
        // Predicated region
        $region37: #{tpu_custom_call.1} parent=35 // pred_check
          %p205 = pneg %p87
        $region38: #{tpu_custom_call.1} parent=35 // pred_check_branch
          %207 = sbr.rel (%p205) target = $region40
        $region39: #{tpu_custom_call.1} parent=35 // pred_region
          %s208 = sand.u32 %s72, 1
          %s209 = scalar_lea.sflag [#allocation3], %s208
          %s210 = sand.u32 %s72, 1
          %s211 = smul.addr %s210, 24
          %s212 = scalar_lea.vmem [#allocation2], %s211
          %213 = dma.done %s209, 384
        $region40: #{tpu_custom_call.1} parent=35 // pred_fallthru
          _
      $region36: #{tpu_custom_call.1} parent=5 // pred_fallthru
        _
    $region6: #{tpu_custom_call.1} parent=1 // loop_footer
      %s15 = sadd.s32 1, %s11
    $region7: #{tpu_custom_call.1} parent=1 // loop_footer_branch
      %10 = sbr.rel target = $region3
    $region8: #{tpu_custom_call.1} parent=1 // loop_exit
      _
    %214 = vsyncpa [#allocation3], 1
    %s215 = scalar_lea.sflag [#allocation3], 1
    %216 = vsyncpa %s215, 1

</llo_original>
